<compile_context>
chip_gen: v7x
topology: tpu7x:2x2x1
jax: 0.10.0
libtpu: 0.0.40
codegen_flags: <defaults>
</compile_context>

<pallas_src>
import functools
import math

import jax
import jax.numpy as jnp
from jax.experimental import pallas as pl
from jax.experimental.pallas import tpu as pltpu


# ----------------------------------------------------------------------------
# Parameter construction
# ----------------------------------------------------------------------------
def gaussian_taps_1d(size, sigma):
    """Normalized 1D Gaussian taps as Python floats (compile-time constants).

    The per-dim 1/(sigma*sqrt(2*pi)) factors of the original module cancel
    under the joint normalization, so outer(taps_h, taps_w) equals the
    PyTorch buffer exactly.
    """
    mean = (size - 1) / 2.0
    g = [math.exp(-(((i - mean) / sigma) ** 2) / 2.0) for i in range(int(size))]
    s = sum(g)
    return tuple(v / s for v in g)


def gaussian_weight(channels, kernel_size, sigma, dim=2):
    """PyTorch-equivalent (channels, 1, K0, K1) buffer (reference check only)."""
    if isinstance(kernel_size, (int, float)):
        kernel_size = [int(kernel_size)] * dim
    if isinstance(sigma, (int, float)):
        sigma = [float(sigma)] * dim
    grids = jnp.meshgrid(
        *[jnp.arange(s, dtype=jnp.float32) for s in kernel_size], indexing="ij"
    )
    kernel = jnp.array(1.0, dtype=jnp.float32)
    for size, std, mgrid in zip(kernel_size, sigma, grids):
        mean = (size - 1) / 2.0
        kernel = kernel * (
            1.0 / (std * math.sqrt(2.0 * math.pi))
            * jnp.exp(-(((mgrid - mean) / std) ** 2) / 2.0)
        )
    kernel = kernel / jnp.sum(kernel)
    weight = jnp.broadcast_to(kernel[None, None], (channels, 1) + kernel.shape)
    return weight, tuple(int(k) for k in kernel_size)


def _round_up_128(x):
    return ((int(x) + 127) // 128) * 128


def _pick_channel_block(C, Hp, Wp, H, W, in_bytes, budget_bytes=24 * 1024 * 1024):
    """Largest divisor of C whose packed block + scratch fits the VMEM budget."""
    best = 1
    for cb in range(1, C + 1):
        if C % cb:
            continue
        npad = _round_up_128(cb * Wp)
        need = (
            Hp * npad * 4                 # packed padded scratch (f32)
            + 2 * cb * H * W * in_bytes   # double-buffered input block
            + 2 * Hp * npad * in_bytes    # double-buffered output block (upper bound)
            + 8 * npad * 8 * 4            # live-vreg headroom for the tap MACs
        )
        if need <= budget_bytes:
            best = cb
    return best


# ----------------------------------------------------------------------------
# Pallas kernel: separable depthwise Gaussian blur, CB channels lane-packed
# ----------------------------------------------------------------------------
def _smoothing_kernel(x_ref, o_ref, xp_ref, *,
                      taps_h, taps_w, pad, H, W, CB, Wp, npad):
    # x_ref:  (1, CB, H, W)          CB channels of one image
    # o_ref:  (1, 1, H_out, npad)    lane-packed output slab
    # xp_ref: (Hp, npad)             padded scratch; channel cl occupies lanes
    #                                [cl*Wp, (cl+1)*Wp) with `pad` zero columns
    #                                on each side of its data.
    K0, K1 = len(taps_h), len(taps_w)
    Hp = H + 2 * pad
    H_out = Hp - K0 + 1
    f32 = jnp.float32

    # --- Zero only the border strips; copy the interior exactly once. ---
    if pad > 0:
        zrow = jnp.zeros((pad, npad), f32)
        xp_ref[0:pad, :] = zrow
        xp_ref[Hp - pad:Hp, :] = zrow
        zcol = jnp.zeros((Hp, pad), f32)
        for cl in range(CB):
            base = cl * Wp
            xp_ref[:, base:base + pad] = zcol
            xp_ref[:, base + pad + W:base + Wp] = zcol
    if npad > CB * Wp:
        xp_ref[:, CB * Wp:npad] = jnp.zeros((Hp, npad - CB * Wp), f32)
    for cl in range(CB):
        col = cl * Wp + pad
        xp_ref[pad:pad + H, col:col + W] = x_ref[0, cl].astype(f32)

    # --- Pass 1: 1D Gaussian along H (sublane-shifted scratch loads). ---
    # TODO(synk): for huge planes, run this in 8-row strips under
    # lax.fori_loop(unroll=True) to bound live vreg ranges.
    tmp = taps_h[0] * xp_ref[0:H_out, :]
    for di in range(1, K0):
        tmp = tmp + taps_h[di] * xp_ref[di:di + H_out, :]

    # --- Pass 2: 1D Gaussian along W on the in-register value via XLU lane
    # rolls (no tmp scratch round-trip).  Shifts are centered at
    # off = (K1-1)//2, so for odd K1 the symmetric taps make the result
    # independent of the rotate sign convention; valid output column j of
    # channel cl lands at packed lane cl*Wp + off + j and, thanks to the
    # per-channel pad columns, never reads another channel's real data.
    off = (K1 - 1) // 2
    acc = None
    for dj in range(K1):
        k = (off - dj) % npad
        term = tmp if k == 0 else pltpu.roll(tmp, shift=k, axis=1)
        t = taps_w[dj] * term
        acc = t if acc is None else acc + t
    o_ref[0, 0] = acc.astype(o_ref.dtype)


def gaussian_smoothing(x_nchw, kernel_size, sigma):
    """Forward pass equivalent to GaussianSmoothing.forward for dim=2.

    stride=1, padding=kernel_size[0]//2 on BOTH spatial dims (faithful to the
    original module), groups=C, cross-correlation semantics.
    """
    if isinstance(kernel_size, (int, float)):
        kernel_size = [int(kernel_size)] * 2
    if isinstance(sigma, (int, float)):
        sigma = [float(sigma)] * 2

    N, C, H, W = x_nchw.shape
    K0, K1 = int(kernel_size[0]), int(kernel_size[1])
    pad = K0 // 2  # original module uses kernel_size[0] // 2 for both dims
    Hp, Wp = H + 2 * pad, W + 2 * pad
    H_out = Hp - K0 + 1
    W_out = Wp - K1 + 1

    taps_h = gaussian_taps_1d(K0, float(sigma[0]))
    taps_w = gaussian_taps_1d(K1, float(sigma[1]))

    in_bytes = jnp.dtype(x_nchw.dtype).itemsize
    CB = _pick_channel_block(C, Hp, Wp, H, W, in_bytes)
    G = C // CB
    npad = _round_up_128(CB * Wp)

    kern = functools.partial(
        _smoothing_kernel, taps_h=taps_h, taps_w=taps_w,
        pad=pad, H=H, W=W, CB=CB, Wp=Wp, npad=npad,
    )

    out_packed = pl.pallas_call(
        kern,
        out_shape=jax.ShapeDtypeStruct((N, G, H_out, npad), x_nchw.dtype),
        grid=(N, G),
        in_specs=[
            pl.BlockSpec((1, CB, H, W), lambda n, g: (n, g, 0, 0)),
        ],
        out_specs=pl.BlockSpec((1, 1, H_out, npad), lambda n, g: (n, g, 0, 0)),
        scratch_shapes=[
            pltpu.VMEM((Hp, npad), jnp.float32),
        ],
        compiler_params=pltpu.CompilerParams(
            dimension_semantics=("parallel", "parallel"),
            vmem_limit_bytes=48 * 1024 * 1024,
        ),
    )(x_nchw)

    # Unpack the lane-dense slab back to NCHW (pure XLA layout plumbing).
    off = (K1 - 1) // 2
    out = out_packed[..., :CB * Wp].reshape(N, G, H_out, CB, Wp)
    out = out[..., off:off + W_out]
    out = jnp.transpose(out, (0, 1, 3, 2, 4)).reshape(N, C, H_out, W_out)
    return out


# ----------------------------------------------------------------------------
# Demo / self-check
# ----------------------------------------------------------------------------
if __name__ == "__main__":
    channels, kernel_size, sigma = 4, 5, 2.0
    N, H, W = 2, 16, 16

    key = jax.random.PRNGKey(0)
    x = jax.random.normal(key, (N, channels, H, W), dtype=jnp.float32)

    out = gaussian_smoothing(x, kernel_size, sigma)
    out = jax.block_until_ready(out)

    # Reference: XLA depthwise conv with identical semantics.
    weight, ks = gaussian_weight(channels, kernel_size, sigma, dim=2)
    p = ks[0] // 2
    ref = jax.lax.conv_general_dilated(
        x, weight.astype(jnp.float32),
        window_strides=(1, 1),
        padding=((p, p), (p, p)),
        dimension_numbers=("NCHW", "OIHW", "NCHW"),
        feature_group_count=channels,
    )
    assert out.shape == ref.shape
    assert jnp.allclose(out, ref, atol=1e-5, rtol=1e-5)

    print("KERNEL_OK")
</pallas_src>

<mosaic_0001>
module attributes {stable_mosaic.version = 11 : i64} {
  func.func @_smoothing_kernel(%arg0: i32, %arg1: i32, %arg2: memref<1x4x16x16xf32, #tpu.memory_space<vmem>>, %arg3: memref<1x1x16x128xf32, #tpu.memory_space<vmem>>, %arg4: memref<20x128xf32, #tpu.memory_space<vmem>>) attributes {dimension_semantics = [#tpu.dimension_semantics<parallel>, #tpu.dimension_semantics<parallel>], iteration_bounds = array<i64: 2, 1>, scalar_prefetch = 0 : i64, scratch_operands = 1 : i64, tpu.core_type = #tpu.core_type<tc>, window_params = [{transform_indices = @transform_0, window_bounds = array<i64: 1, 4, 16, 16>}, {transform_indices = @transform_1, window_bounds = array<i64: 1, 1, 16, 128>}]} {
    %cst = arith.constant 0.000000e+00 : f32
    %0 = vector.broadcast %cst : f32 to vector<2x128xf32>
    %c0 = arith.constant 0 : index
    %c0_0 = arith.constant 0 : index
    %1 = vector.load %arg4[%c0, %c0_0] : memref<20x128xf32, #tpu.memory_space<vmem>>, vector<2x128xf32>
    tpu.vector_store %arg4[%c0, %c0_0], %0 {strides = array<i32>} : memref<20x128xf32, #tpu.memory_space<vmem>>, vector<2x128xf32>,
    %c18 = arith.constant 18 : index
    %c0_1 = arith.constant 0 : index
    %2 = vector.load %arg4[%c18, %c0_1] : memref<20x128xf32, #tpu.memory_space<vmem>>, vector<2x128xf32>
    tpu.vector_store %arg4[%c18, %c0_1], %0 {strides = array<i32>} : memref<20x128xf32, #tpu.memory_space<vmem>>, vector<2x128xf32>,
    %cst_2 = arith.constant 0.000000e+00 : f32
    %3 = vector.broadcast %cst_2 : f32 to vector<20x2xf32>
    %c0_3 = arith.constant 0 : index
    %c0_4 = arith.constant 0 : index
    %4 = vector.load %arg4[%c0_3, %c0_4] : memref<20x128xf32, #tpu.memory_space<vmem>>, vector<20x2xf32>
    tpu.vector_store %arg4[%c0_3, %c0_4], %3 {strides = array<i32>} : memref<20x128xf32, #tpu.memory_space<vmem>>, vector<20x2xf32>,
    %c0_5 = arith.constant 0 : index
    %c18_6 = arith.constant 18 : index
    %5 = vector.load %arg4[%c0_5, %c18_6] : memref<20x128xf32, #tpu.memory_space<vmem>>, vector<20x2xf32>
    tpu.vector_store %arg4[%c0_5, %c18_6], %3 {strides = array<i32>} : memref<20x128xf32, #tpu.memory_space<vmem>>, vector<20x2xf32>,
    %c0_7 = arith.constant 0 : index
    %c20 = arith.constant 20 : index
    %6 = vector.load %arg4[%c0_7, %c20] : memref<20x128xf32, #tpu.memory_space<vmem>>, vector<20x2xf32>
    tpu.vector_store %arg4[%c0_7, %c20], %3 {strides = array<i32>} : memref<20x128xf32, #tpu.memory_space<vmem>>, vector<20x2xf32>,
    %c0_8 = arith.constant 0 : index
    %c38 = arith.constant 38 : index
    %7 = vector.load %arg4[%c0_8, %c38] : memref<20x128xf32, #tpu.memory_space<vmem>>, vector<20x2xf32>
    tpu.vector_store %arg4[%c0_8, %c38], %3 {strides = array<i32>} : memref<20x128xf32, #tpu.memory_space<vmem>>, vector<20x2xf32>,
    %c0_9 = arith.constant 0 : index
    %c40 = arith.constant 40 : index
    %8 = vector.load %arg4[%c0_9, %c40] : memref<20x128xf32, #tpu.memory_space<vmem>>, vector<20x2xf32>
    tpu.vector_store %arg4[%c0_9, %c40], %3 {strides = array<i32>} : memref<20x128xf32, #tpu.memory_space<vmem>>, vector<20x2xf32>,
    %c0_10 = arith.constant 0 : index
    %c58 = arith.constant 58 : index
    %9 = vector.load %arg4[%c0_10, %c58] : memref<20x128xf32, #tpu.memory_space<vmem>>, vector<20x2xf32>
    tpu.vector_store %arg4[%c0_10, %c58], %3 {strides = array<i32>} : memref<20x128xf32, #tpu.memory_space<vmem>>, vector<20x2xf32>,
    %c0_11 = arith.constant 0 : index
    %c60 = arith.constant 60 : index
    %10 = vector.load %arg4[%c0_11, %c60] : memref<20x128xf32, #tpu.memory_space<vmem>>, vector<20x2xf32>
    tpu.vector_store %arg4[%c0_11, %c60], %3 {strides = array<i32>} : memref<20x128xf32, #tpu.memory_space<vmem>>, vector<20x2xf32>,
    %c0_12 = arith.constant 0 : index
    %c78 = arith.constant 78 : index
    %11 = vector.load %arg4[%c0_12, %c78] : memref<20x128xf32, #tpu.memory_space<vmem>>, vector<20x2xf32>
    tpu.vector_store %arg4[%c0_12, %c78], %3 {strides = array<i32>} : memref<20x128xf32, #tpu.memory_space<vmem>>, vector<20x2xf32>,
    %cst_13 = arith.constant 0.000000e+00 : f32
    %12 = vector.broadcast %cst_13 : f32 to vector<20x48xf32>
    %c0_14 = arith.constant 0 : index
    %c80 = arith.constant 80 : index
    %13 = vector.load %arg4[%c0_14, %c80] : memref<20x128xf32, #tpu.memory_space<vmem>>, vector<20x48xf32>
    tpu.vector_store %arg4[%c0_14, %c80], %12 {strides = array<i32>} : memref<20x128xf32, #tpu.memory_space<vmem>>, vector<20x48xf32>,
    %c0_15 = arith.constant 0 : index
    %c0_16 = arith.constant 0 : index
    %c0_17 = arith.constant 0 : index
    %c0_18 = arith.constant 0 : index
    %14 = vector.load %arg2[%c0_15, %c0_16, %c0_17, %c0_18] : memref<1x4x16x16xf32, #tpu.memory_space<vmem>>, vector<1x1x16x16xf32>
    %15 = vector.shape_cast %14 : vector<1x1x16x16xf32> to vector<16x16xf32>
    %c2 = arith.constant 2 : index
    %c2_19 = arith.constant 2 : index
    %16 = vector.load %arg4[%c2, %c2_19] : memref<20x128xf32, #tpu.memory_space<vmem>>, vector<16x16xf32>
    tpu.vector_store %arg4[%c2, %c2_19], %15 {strides = array<i32>} : memref<20x128xf32, #tpu.memory_space<vmem>>, vector<16x16xf32>,
    %c0_20 = arith.constant 0 : index
    %c1 = arith.constant 1 : index
    %c0_21 = arith.constant 0 : index
    %c0_22 = arith.constant 0 : index
    %17 = vector.load %arg2[%c0_20, %c1, %c0_21, %c0_22] : memref<1x4x16x16xf32, #tpu.memory_space<vmem>>, vector<1x1x16x16xf32>
    %18 = vector.shape_cast %17 : vector<1x1x16x16xf32> to vector<16x16xf32>
    %c2_23 = arith.constant 2 : index
    %c22 = arith.constant 22 : index
    %19 = vector.load %arg4[%c2_23, %c22] : memref<20x128xf32, #tpu.memory_space<vmem>>, vector<16x16xf32>
    tpu.vector_store %arg4[%c2_23, %c22], %18 {strides = array<i32>} : memref<20x128xf32, #tpu.memory_space<vmem>>, vector<16x16xf32>,
    %c0_24 = arith.constant 0 : index
    %c2_25 = arith.constant 2 : index
    %c0_26 = arith.constant 0 : index
    %c0_27 = arith.constant 0 : index
    %20 = vector.load %arg2[%c0_24, %c2_25, %c0_26, %c0_27] : memref<1x4x16x16xf32, #tpu.memory_space<vmem>>, vector<1x1x16x16xf32>
    %21 = vector.shape_cast %20 : vector<1x1x16x16xf32> to vector<16x16xf32>
    %c2_28 = arith.constant 2 : index
    %c42 = arith.constant 42 : index
    %22 = vector.load %arg4[%c2_28, %c42] : memref<20x128xf32, #tpu.memory_space<vmem>>, vector<16x16xf32>
    tpu.vector_store %arg4[%c2_28, %c42], %21 {strides = array<i32>} : memref<20x128xf32, #tpu.memory_space<vmem>>, vector<16x16xf32>,
    %c0_29 = arith.constant 0 : index
    %c3 = arith.constant 3 : index
    %c0_30 = arith.constant 0 : index
    %c0_31 = arith.constant 0 : index
    %23 = vector.load %arg2[%c0_29, %c3, %c0_30, %c0_31] : memref<1x4x16x16xf32, #tpu.memory_space<vmem>>, vector<1x1x16x16xf32>
    %24 = vector.shape_cast %23 : vector<1x1x16x16xf32> to vector<16x16xf32>
    %c2_32 = arith.constant 2 : index
    %c62 = arith.constant 62 : index
    %25 = vector.load %arg4[%c2_32, %c62] : memref<20x128xf32, #tpu.memory_space<vmem>>, vector<16x16xf32>
    tpu.vector_store %arg4[%c2_32, %c62], %24 {strides = array<i32>} : memref<20x128xf32, #tpu.memory_space<vmem>>, vector<16x16xf32>,
    %c0_33 = arith.constant 0 : index
    %c0_34 = arith.constant 0 : index
    %26 = vector.load %arg4[%c0_33, %c0_34] : memref<20x128xf32, #tpu.memory_space<vmem>>, vector<16x128xf32>
    %cst_35 = arith.constant 0.152469143 : f32
    %27 = vector.broadcast %cst_35 : f32 to vector<16x128xf32>
    %28 = arith.mulf %27, %26 : vector<16x128xf32>
    %c1_36 = arith.constant 1 : index
    %c0_37 = arith.constant 0 : index
    %29 = vector.load %arg4[%c1_36, %c0_37] : memref<20x128xf32, #tpu.memory_space<vmem>>, vector<16x128xf32>
    %cst_38 = arith.constant 0.221841291 : f32
    %30 = vector.broadcast %cst_38 : f32 to vector<16x128xf32>
    %31 = arith.mulf %30, %29 : vector<16x128xf32>
    %32 = arith.addf %28, %31 : vector<16x128xf32>
    %c2_39 = arith.constant 2 : index
    %c0_40 = arith.constant 0 : index
    %33 = vector.load %arg4[%c2_39, %c0_40] : memref<20x128xf32, #tpu.memory_space<vmem>>, vector<16x128xf32>
    %cst_41 = arith.constant 0.251379132 : f32
    %34 = vector.broadcast %cst_41 : f32 to vector<16x128xf32>
    %35 = arith.mulf %34, %33 : vector<16x128xf32>
    %36 = arith.addf %32, %35 : vector<16x128xf32>
    %c3_42 = arith.constant 3 : index
    %c0_43 = arith.constant 0 : index
    %37 = vector.load %arg4[%c3_42, %c0_43] : memref<20x128xf32, #tpu.memory_space<vmem>>, vector<16x128xf32>
    %cst_44 = arith.constant 0.221841291 : f32
    %38 = vector.broadcast %cst_44 : f32 to vector<16x128xf32>
    %39 = arith.mulf %38, %37 : vector<16x128xf32>
    %40 = arith.addf %36, %39 : vector<16x128xf32>
    %c4 = arith.constant 4 : index
    %c0_45 = arith.constant 0 : index
    %41 = vector.load %arg4[%c4, %c0_45] : memref<20x128xf32, #tpu.memory_space<vmem>>, vector<16x128xf32>
    %cst_46 = arith.constant 0.152469143 : f32
    %42 = vector.broadcast %cst_46 : f32 to vector<16x128xf32>
    %43 = arith.mulf %42, %41 : vector<16x128xf32>
    %44 = arith.addf %40, %43 : vector<16x128xf32>
    %c2_i32 = arith.constant 2 : i32
    %45 = tpu.dynamic_rotate %44 by %c2_i32 dim 1 : vector<16x128xf32>, i32 -> vector<16x128xf32>
    %cst_47 = arith.constant 0.152469143 : f32
    %46 = vector.broadcast %cst_47 : f32 to vector<16x128xf32>
    %47 = arith.mulf %46, %45 : vector<16x128xf32>
    %c1_i32 = arith.constant 1 : i32
    %48 = tpu.dynamic_rotate %44 by %c1_i32 dim 1 : vector<16x128xf32>, i32 -> vector<16x128xf32>
    %cst_48 = arith.constant 0.221841291 : f32
    %49 = vector.broadcast %cst_48 : f32 to vector<16x128xf32>
    %50 = arith.mulf %49, %48 : vector<16x128xf32>
    %51 = arith.addf %47, %50 : vector<16x128xf32>
    %cst_49 = arith.constant 0.251379132 : f32
    %52 = vector.broadcast %cst_49 : f32 to vector<16x128xf32>
    %53 = arith.mulf %52, %44 : vector<16x128xf32>
    %54 = arith.addf %51, %53 : vector<16x128xf32>
    %c127_i32 = arith.constant 127 : i32
    %55 = tpu.dynamic_rotate %44 by %c127_i32 dim 1 : vector<16x128xf32>, i32 -> vector<16x128xf32>
    %cst_50 = arith.constant 0.221841291 : f32
    %56 = vector.broadcast %cst_50 : f32 to vector<16x128xf32>
    %57 = arith.mulf %56, %55 : vector<16x128xf32>
    %58 = arith.addf %54, %57 : vector<16x128xf32>
    %c126_i32 = arith.constant 126 : i32
    %59 = tpu.dynamic_rotate %44 by %c126_i32 dim 1 : vector<16x128xf32>, i32 -> vector<16x128xf32>
    %cst_51 = arith.constant 0.152469143 : f32
    %60 = vector.broadcast %cst_51 : f32 to vector<16x128xf32>
    %61 = arith.mulf %60, %59 : vector<16x128xf32>
    %62 = arith.addf %58, %61 : vector<16x128xf32>
    %c0_52 = arith.constant 0 : index
    %c0_53 = arith.constant 0 : index
    %c0_54 = arith.constant 0 : index
    %c0_55 = arith.constant 0 : index
    %63 = vector.load %arg3[%c0_52, %c0_53, %c0_54, %c0_55] : memref<1x1x16x128xf32, #tpu.memory_space<vmem>>, vector<1x1x16x128xf32>
    %64 = vector.shape_cast %63 : vector<1x1x16x128xf32> to vector<16x128xf32>
    %65 = vector.shape_cast %62 : vector<16x128xf32> to vector<1x1x16x128xf32>
    tpu.vector_store %arg3[%c0_52, %c0_53, %c0_54, %c0_55], %65 {strides = array<i32>} : memref<1x1x16x128xf32, #tpu.memory_space<vmem>>, vector<1x1x16x128xf32>,
    return
  }
  func.func @transform_0(%arg0: i32, %arg1: i32) -> (i32, i32, i32, i32) {
    %c0_i32 = arith.constant 0 : i32
    %c0_i32_0 = arith.constant 0 : i32
    %c0_i32_1 = arith.constant 0 : i32
    return %arg0, %arg1, %c0_i32, %c0_i32_0 : i32, i32, i32, i32
  }
  func.func @transform_1(%arg0: i32, %arg1: i32) -> (i32, i32, i32, i32) {
    %c0_i32 = arith.constant 0 : i32
    %c0_i32_0 = arith.constant 0 : i32
    %c0_i32_1 = arith.constant 0 : i32
    return %arg0, %arg1, %c0_i32, %c0_i32_0 : i32, i32, i32, i32
  }
}

</mosaic_0001>

<llo_original>
// kernel: tpu_custom_call.1
$region0: #{tpu_custom_call.1}
  #allocation0 [shape = 'u32[]', space=smem, size = 0x4, offset = 0x4, fixed_abs, tag = 'smem constant byte address 0x4 - core index']
  #allocation1 [shape = 'u32[144,128]{1,0:T(1,128)}', space=vmem, size = 0x12000, scoped, tag = 'internal scratch']
  #allocation2 [shape = 'f32[20,128]{1,0:T(8,128)}', space=vmem, size = 0x3000, scoped, tag = 'scratch operand']
  %s0 = inlined_call_operand.hbm [shape: f32[2,4,16,16], index: 0, kind: input, shape index: {}]
  %s1 = inlined_call_operand.hbm [shape: f32[2,1,16,128], index: 1, kind: output, shape index: {}]
  %s2 = sld [smem:[#allocation0]]
  $region41: #{tpu_custom_call.1} parent=0
    _
  %s4 = ssub.s32 1, %s2
  %s5 = scalar_select 0, %s4, %s2
  $region1: #{tpu_custom_call.1} parent=0
    #allocation3 [shape = 'u8[65536]{0}', space=vmem, size = 0x10000, scoped, tag = 'input window, operand 0']
    #allocation4 [shape = 's32[2]{0}', space=sflag, size = 0x8, scoped, tag = 'scoped memory for tpu_custom_call.1']
    #allocation5 [shape = 's32[2]{0}', space=sflag, size = 0x8, scoped, tag = 'scoped memory for tpu_custom_call.1']
    #allocation6 [shape = 'u8[16384]{0}', space=vmem, size = 0x4000, scoped, tag = 'output window, operand 0']
    %6 = vsyncpa [#allocation4], 0
    %s7 = scalar_lea.sflag [#allocation4], 1
    %8 = vsyncpa %s7, 0
    %9 = vsyncpa [#allocation5], 0
    %s10 = scalar_lea.sflag [#allocation5], 1
    %11 = vsyncpa %s10, 0
    loop: start=0, step=1, limit=4
    $region2: #{tpu_custom_call.1} parent=1 // loop_pre_header
      _
    $region3: #{tpu_custom_call.1} parent=1 // loop_header
      %s13 = sphi 0, %s17
      %p14 = scmp.ge.s32.totalorder %s13, 4
      %s20 = sphi 0, %s32
      %s21 = sphi 0, %s28
      %s22 = sphi 0, %s20
      %s23 = sphi 0, %s21
      %s24 = sphi 0, %s22
      %s25 = sphi 0, %s23
      %s37 = sphi 0, %s39
      %s40 = sphi 0, %s37
      %s41 = sphi 0, %s40
      %s57 = sphi 0, %s41
      %s65 = sphi 0, %s67
      %s68 = sphi 0, %s65
      %s69 = sphi 0, %s68
      %s85 = sphi 0, %s69
    $region4: #{tpu_custom_call.1} parent=1 // loop_header_branch
      %16 = sbr.rel (%p14) target = $region8
    $region5: #{tpu_custom_call.1} parent=1 // loop_body
      %s18 = ssub.s32 %s13, 1
      %s19 = ssub.s32 %s13, 2
      %s26 = sadd.s32 1, %s21
      %p27 = scmp.ge.s32.totalorder %s26, 1
      %s28 = scalar_select %p27, 0, %s26
      %s29 = sadd.s32 1, %s20
      %s30 = scalar_select %p27, %s29, %s20
      %p31 = scmp.ge.s32.totalorder %s30, 2
      %s32 = scalar_select %p31, 0, %s30
      %s33 = ssub.s32 %s20, %s32
      %s34 = ssub.s32 %s21, %s28
      %s35 = sor.u32 %s33, %s34
      %p36 = scmp.eq.s32.totalorder %s35, 0
      %s38 = sadd.s32 %s37, 1
      %s39 = scalar_select %p36, %s37, %s38
      %p42 = pneg %p36
      %p43 = scmp.eq.s32.totalorder %s13, 1
      %p44 = por %p42, %p43
      %p45 = scmp.ne.s32.totalorder %s37, %s40
      %p46 = scmp.eq.s32.totalorder %s13, 0
      %p47 = por %p45, %p46
      %p48 = scmp.ne.s32.totalorder %s37, %s40
      %p49 = scmp.eq.s32.totalorder %s18, 1
      %p50 = por %p48, %p49
      %p51 = scmp.ne.s32.totalorder %s40, %s41
      %p52 = scmp.eq.s32.totalorder %s18, 0
      %p53 = por %p51, %p52
      %p54 = scmp.ne.s32.totalorder %s40, %s41
      %p55 = scmp.eq.s32.totalorder %s19, 1
      %p56 = por %p54, %p55
      %p58 = scmp.ne.s32.totalorder %s41, %s57
      %p59 = scmp.eq.s32.totalorder %s19, 0
      %p60 = por %p58, %p59
      %s61 = ssub.s32 %s20, %s32
      %s62 = ssub.s32 %s21, %s28
      %s63 = sor.u32 %s61, %s62
      %p64 = scmp.eq.s32.totalorder %s63, 0
      %s66 = sadd.s32 %s65, 1
      %s67 = scalar_select %p64, %s65, %s66
      %p70 = pneg %p64
      %p71 = scmp.eq.s32.totalorder %s13, 1
      %p72 = por %p70, %p71
      %p73 = scmp.ne.s32.totalorder %s65, %s68
      %p74 = scmp.eq.s32.totalorder %s13, 0
      %p75 = por %p73, %p74
      %p76 = scmp.ne.s32.totalorder %s65, %s68
      %p77 = scmp.eq.s32.totalorder %s18, 1
      %p78 = por %p76, %p77
      %p79 = scmp.ne.s32.totalorder %s68, %s69
      %p80 = scmp.eq.s32.totalorder %s18, 0
      %p81 = por %p79, %p80
      %p82 = scmp.ne.s32.totalorder %s68, %s69
      %p83 = scmp.eq.s32.totalorder %s19, 1
      %p84 = por %p82, %p83
      %p86 = scmp.ne.s32.totalorder %s69, %s85
      %p87 = scmp.eq.s32.totalorder %s19, 0
      %p88 = por %p86, %p87
      %p89 = scmp.le.s32.totalorder 1, %s13
      %p90 = scmp.lt.s32.totalorder %s13, 3
      %p91 = pnand %p89, %p90
      %p92 = pneg %p91
      // Predicated region
      $region9: #{tpu_custom_call.1} parent=5 // pred_check
        _
      $region10: #{tpu_custom_call.1} parent=5 // pred_check_branch
        %94 = sbr.rel (%p91) target = $region12
      $region11: #{tpu_custom_call.1} parent=5 // pred_region
        %s95 = ssub.s32 %s13, 1
      $region12: #{tpu_custom_call.1} parent=5 // pred_fallthru
        _
      %p96 = scmp.lt.s32.totalorder %s13, 2
      // Predicated region
      $region13: #{tpu_custom_call.1} parent=5 // pred_check
        %p97 = pneg %p96
      $region14: #{tpu_custom_call.1} parent=5 // pred_check_branch
        %99 = sbr.rel (%p97) target = $region16
      $region15: #{tpu_custom_call.1} parent=5 // pred_region
        // Predicated region
        $region17: #{tpu_custom_call.1} parent=15 // pred_check
          %p100 = pneg %p47
        $region18: #{tpu_custom_call.1} parent=15 // pred_check_branch
          %102 = sbr.rel (%p100) target = $region20
        $region19: #{tpu_custom_call.1} parent=15 // pred_region
          %s103 = sand.u32 %s37, 1
          %s104 = scalar_lea.sflag [#allocation4], %s103
          %s105 = sand.u32 %s37, 1
          %s106 = smul.addr %s105, 64
          %s107 = scalar_lea.vmem [#allocation3], %s106
          %s108 = smul.u32 4, %s21
          %s110 = ssub.s32 1024, 1024
          %111 = vsyncadd %s104, %s110
          %s112 = smul.addr %s108, 2
          %s113 = smul.addr %s20, 8
          %s114 = sadd.s32 %s112, %s113
          %s115 = smul.addr %s114, 128
          %s116 = scalar_lea.hbm %s0, %s115
          %s117 = sshll.u32 %s107, 4
          %s118 = int_to_ptr.vmem [resolvable:$true] %s117
          %123 = dma.hbm_to_vmem [thread:$0]  %s116, 1024, %s118, %s104, 128, 128, 8
        $region20: #{tpu_custom_call.1} parent=15 // pred_fallthru
          _
      $region16: #{tpu_custom_call.1} parent=5 // pred_fallthru
        _
      %p124 = scmp.le.s32.totalorder 1, %s13
      %p125 = scmp.lt.s32.totalorder %s13, 3
      %p126 = pnand %p124, %p125
      %p127 = pneg %p126
      // Predicated region
      $region21: #{tpu_custom_call.1} parent=5 // pred_check
        _
      $region22: #{tpu_custom_call.1} parent=5 // pred_check_branch
        %129 = sbr.rel (%p126) target = $region24
      $region23: #{tpu_custom_call.1} parent=5 // pred_region
        %s130 = ssub.s32 %s13, 1
        %s131 = sand.u32 %s40, 1
        %s132 = scalar_lea.sflag [#allocation4], %s131
        %s133 = sand.u32 %s40, 1
        %s134 = smul.addr %s133, 64
        %s135 = scalar_lea.vmem [#allocation3], %s134
        // Predicated region
        $region25: #{tpu_custom_call.1} parent=23 // pred_check
          %p136 = pneg %p53
        $region26: #{tpu_custom_call.1} parent=23 // pred_check_branch
          %138 = sbr.rel (%p136) target = $region28
        $region27: #{tpu_custom_call.1} parent=23 // pred_region
          %139 = dma.done %s132, 1024
        $region28: #{tpu_custom_call.1} parent=23 // pred_fallthru
          _
        %s140 = sand.u32 %s40, 1
        %s141 = scalar_lea.sflag [#allocation4], %s140
        %s142 = sand.u32 %s40, 1
        %s143 = smul.addr %s142, 64
        %s144 = scalar_lea.vmem [#allocation3], %s143
        %p145 = pneg %p53
        %p146 = pneg %p50
        %p147 = pneg %p81
        %p148 = pneg %p78
        %s149 = sand.u32 %s68, 1
        %s150 = scalar_lea.sflag [#allocation5], %s149
        %s151 = sand.u32 %s68, 1
        %s152 = smul.addr %s151, 16
        %s153 = scalar_lea.vmem [#allocation6], %s152
        %s154 = smul.u32 4, %s23
        %155 = vst [vmem:[#allocation2] sm:$0x3] 0.0
        %156 = vst [vmem:[#allocation2 + $0x12] sm:$0x3] 0.0
        %vm157 = vcmask 15360
        %158 = vst.msk [vmem:[#allocation2] sm:$0xff] %vm157, 0.0
        %159 = vst.msk [vmem:[#allocation2 + $0x8] sm:$0xff] %vm157, 0.0
        %vm160 = vcmask 11264
        %161 = vst.msk [vmem:[#allocation2 + $0x10] sm:$0xf] %vm160, 0.0
        %vm162 = vcmask 162960
        %163 = vst.msk [vmem:[#allocation2] sm:$0xff] %vm162, 0.0
        %164 = vst.msk [vmem:[#allocation2 + $0x8] sm:$0xff] %vm162, 0.0
        %vm165 = vcmask 158864
        %166 = vst.msk [vmem:[#allocation2 + $0x10] sm:$0xf] %vm165, 0.0
        %vm167 = vcmask 179360
        %168 = vst.msk [vmem:[#allocation2] sm:$0xff] %vm167, 0.0
        %169 = vst.msk [vmem:[#allocation2 + $0x8] sm:$0xff] %vm167, 0.0
        %vm170 = vcmask 175264
        %171 = vst.msk [vmem:[#allocation2 + $0x10] sm:$0xf] %vm170, 0.0
        %vm172 = vcmask 326960
        %173 = vst.msk [vmem:[#allocation2] sm:$0xff] %vm172, 0.0
        %174 = vst.msk [vmem:[#allocation2 + $0x8] sm:$0xff] %vm172, 0.0
        %vm175 = vcmask 322864
        %176 = vst.msk [vmem:[#allocation2 + $0x10] sm:$0xf] %vm175, 0.0
        %vm177 = vcmask 343360
        %178 = vst.msk [vmem:[#allocation2] sm:$0xff] %vm177, 0.0
        %179 = vst.msk [vmem:[#allocation2 + $0x8] sm:$0xff] %vm177, 0.0
        %vm180 = vcmask 339264
        %181 = vst.msk [vmem:[#allocation2 + $0x10] sm:$0xf] %vm180, 0.0
        %vm182 = vcmask 490960
        %183 = vst.msk [vmem:[#allocation2] sm:$0xff] %vm182, 0.0
        %184 = vst.msk [vmem:[#allocation2 + $0x8] sm:$0xff] %vm182, 0.0
        %vm185 = vcmask 486864
        %186 = vst.msk [vmem:[#allocation2 + $0x10] sm:$0xf] %vm185, 0.0
        %vm187 = vcmask 507360
        %188 = vst.msk [vmem:[#allocation2] sm:$0xff] %vm187, 0.0
        %189 = vst.msk [vmem:[#allocation2 + $0x8] sm:$0xff] %vm187, 0.0
        %vm190 = vcmask 503264
        %191 = vst.msk [vmem:[#allocation2 + $0x10] sm:$0xf] %vm190, 0.0
        %vm192 = vcmask 654960
        %193 = vst.msk [vmem:[#allocation2] sm:$0xff] %vm192, 0.0
        %194 = vst.msk [vmem:[#allocation2 + $0x8] sm:$0xff] %vm192, 0.0
        %vm195 = vcmask 650864
        %196 = vst.msk [vmem:[#allocation2 + $0x10] sm:$0xf] %vm195, 0.0
        %vm197 = vcmask 1048192
        %198 = vst.msk [vmem:[#allocation2] sm:$0xff] %vm197, 0.0
        %199 = vst.msk [vmem:[#allocation2 + $0x8] sm:$0xff] %vm197, 0.0
        %vm200 = vcmask 1044096
        %201 = vst.msk [vmem:[#allocation2 + $0x10] sm:$0xf] %vm200, 0.0
        %v202 = vld [vmem:[%s135] sm:$0xff]
        %v203 = vld [vmem:[%s135 + $0x8] sm:$0xff]
        %206 = vrot.lane.b32.xlu0 %v202, 2
        %v207 = vpop.permute.xlu0 %206
        %208 = vrot.lane.b32.xlu0 %v203, 2
        %v209 = vpop.permute.xlu0 %208
        %vm212 = vcmask 146448
        %213 = vst.msk [vmem:[#allocation2 + $0x2] sm:$0xff] %vm212, %v207
        %214 = vst.msk [vmem:[#allocation2 + $0xa] sm:$0xff] %vm212, %v209
        %s215 = scalar_lea.vmem %s135, 16 [#allocation3]
        %v216 = vld [vmem:[%s215] sm:$0xff]
        %v217 = vld [vmem:[%s215 + $0x8] sm:$0xff]
        %220 = vrot.lane.b32.xlu0 %v216, 22
        %v221 = vpop.permute.xlu0 %220
        %222 = vrot.lane.b32.xlu0 %v217, 22
        %v223 = vpop.permute.xlu0 %222
        %vm226 = vcmask 310448
        %227 = vst.msk [vmem:[#allocation2 + $0x2] sm:$0xff] %vm226, %v221
        %228 = vst.msk [vmem:[#allocation2 + $0xa] sm:$0xff] %vm226, %v223
        %s229 = scalar_lea.vmem %s135, 32 [#allocation3]
        %v230 = vld [vmem:[%s229] sm:$0xff]
        %v231 = vld [vmem:[%s229 + $0x8] sm:$0xff]
        %234 = vrot.lane.b32.xlu0 %v230, 42
        %v235 = vpop.permute.xlu0 %234
        %236 = vrot.lane.b32.xlu0 %v231, 42
        %v237 = vpop.permute.xlu0 %236
        %vm240 = vcmask 474448
        %241 = vst.msk [vmem:[#allocation2 + $0x2] sm:$0xff] %vm240, %v235
        %242 = vst.msk [vmem:[#allocation2 + $0xa] sm:$0xff] %vm240, %v237
        %s243 = scalar_lea.vmem %s135, 48 [#allocation3]
        %v244 = vld [vmem:[%s243] sm:$0xff]
        %v245 = vld [vmem:[%s243 + $0x8] sm:$0xff]
        %248 = vrot.lane.b32.xlu0 %v244, 62
        %v249 = vpop.permute.xlu0 %248
        %250 = vrot.lane.b32.xlu0 %v245, 62
        %v251 = vpop.permute.xlu0 %250
        %vm254 = vcmask 638448
        %255 = vst.msk [vmem:[#allocation2 + $0x2] sm:$0xff] %vm254, %v249
        %256 = vst.msk [vmem:[#allocation2 + $0xa] sm:$0xff] %vm254, %v251
        %v257 = vld [vmem:[#allocation2] sm:$0xff]
        %v258 = vld [vmem:[#allocation2 + $0x8] sm:$0xff]
        %v259 = vmul.f32 %v257, 0.15246914
        %v260 = vmul.f32 %v258, 0.15246914
        %v261 = vld [vmem:[#allocation2 + $0x1] sm:$0xff]
        %v262 = vld [vmem:[#allocation2 + $0x9] sm:$0xff]
        %v263 = vmul.f32 %v261, 0.22184129
        %v264 = vmul.f32 %v262, 0.22184129
        %v265 = vadd.f32 %v259, %v263
        %v266 = vadd.f32 %v260, %v264
        %v267 = vld [vmem:[#allocation2 + $0x2] sm:$0xff]
        %v268 = vld [vmem:[#allocation2 + $0xa] sm:$0xff]
        %v269 = vmul.f32 %v267, 0.25137913
        %v270 = vmul.f32 %v268, 0.25137913
        %v271 = vadd.f32 %v265, %v269
        %v272 = vadd.f32 %v266, %v270
        %v273 = vld [vmem:[#allocation2 + $0x3] sm:$0xff]
        %v274 = vld [vmem:[#allocation2 + $0xb] sm:$0xff]
        %v275 = vmul.f32 %v273, 0.22184129
        %v276 = vmul.f32 %v274, 0.22184129
        %v277 = vadd.f32 %v271, %v275
        %v278 = vadd.f32 %v272, %v276
        %v279 = vld [vmem:[#allocation2 + $0x4] sm:$0xff]
        %v280 = vld [vmem:[#allocation2 + $0xc] sm:$0xff]
        %v281 = vmul.f32 %v279, 0.15246914
        %v282 = vmul.f32 %v280, 0.15246914
        %v283 = vadd.f32 %v277, %v281
        %v284 = vadd.f32 %v278, %v282
        %285 = vrot.lane.b32.xlu0 %v283, 2
        %v286 = vpop.permute.xlu0 %285
        %287 = vrot.lane.b32.xlu0 %v284, 2
        %v288 = vpop.permute.xlu0 %287
        %v289 = vmul.f32 %v286, 0.15246914
        %v290 = vmul.f32 %v288, 0.15246914
        %291 = vrot.lane.b32.xlu0 %v283, 1
        %v292 = vpop.permute.xlu0 %291
        %293 = vrot.lane.b32.xlu0 %v284, 1
        %v294 = vpop.permute.xlu0 %293
        %v295 = vmul.f32 %v292, 0.22184129
        %v296 = vmul.f32 %v294, 0.22184129
        %v297 = vadd.f32 %v289, %v295
        %v298 = vadd.f32 %v290, %v296
        %v299 = vmul.f32 %v283, 0.25137913
        %v300 = vmul.f32 %v284, 0.25137913
        %v301 = vadd.f32 %v297, %v299
        %v302 = vadd.f32 %v298, %v300
        %303 = vrot.lane.b32.xlu0 %v283, 127
        %v304 = vpop.permute.xlu0 %303
        %305 = vrot.lane.b32.xlu0 %v284, 127
        %v306 = vpop.permute.xlu0 %305
        %v307 = vmul.f32 %v304, 0.22184129
        %v308 = vmul.f32 %v306, 0.22184129
        %v309 = vadd.f32 %v301, %v307
        %v310 = vadd.f32 %v302, %v308
        %311 = vrot.lane.b32.xlu0 %v283, 126
        %v312 = vpop.permute.xlu0 %311
        %313 = vrot.lane.b32.xlu0 %v284, 126
        %v314 = vpop.permute.xlu0 %313
        %v315 = vmul.f32 %v312, 0.15246914
        %v316 = vmul.f32 %v314, 0.15246914
        %v317 = vadd.f32 %v309, %v315
        %v318 = vadd.f32 %v310, %v316
        %319 = vst [vmem:[%s153] sm:$0xff] %v317
        %320 = vst [vmem:[%s153 + $0x8] sm:$0xff] %v318
        %s321 = sand.u32 %s68, 1
        %s322 = scalar_lea.sflag [#allocation5], %s321
        %s323 = sand.u32 %s68, 1
        %s324 = smul.addr %s323, 16
        %s325 = scalar_lea.vmem [#allocation6], %s324
        // Predicated region
        $region29: #{tpu_custom_call.1} parent=23 // pred_check
          %p326 = pneg %p78
        $region30: #{tpu_custom_call.1} parent=23 // pred_check_branch
          %328 = sbr.rel (%p326) target = $region32
        $region31: #{tpu_custom_call.1} parent=23 // pred_region
          %s330 = ssub.s32 256, 256
          %331 = vsyncadd %s322, %s330
          %s332 = smul.addr %s23, 2
          %s333 = smul.addr %s22, 2
          %s334 = sadd.s32 %s332, %s333
          %s335 = smul.addr %s334, 128
          %s336 = scalar_lea.hbm %s1, %s335
          %s337 = sshll.u32 %s325, 4
          %s338 = int_to_ptr.vmem [resolvable:$true] %s337
          %343 = dma.vmem_to_hbm [thread:$0]  %s338, 256, %s336, %s322, 128, 128, 8
        $region32: #{tpu_custom_call.1} parent=23 // pred_fallthru
          _
      $region24: #{tpu_custom_call.1} parent=5 // pred_fallthru
        _
      %p344 = scmp.le.s32.totalorder 2, %s13
      // Predicated region
      $region33: #{tpu_custom_call.1} parent=5 // pred_check
        %p345 = pneg %p344
      $region34: #{tpu_custom_call.1} parent=5 // pred_check_branch
        %347 = sbr.rel (%p345) target = $region36
      $region35: #{tpu_custom_call.1} parent=5 // pred_region
        %s348 = ssub.s32 %s13, 2
        // Predicated region
        $region37: #{tpu_custom_call.1} parent=35 // pred_check
          %p349 = pneg %p84
        $region38: #{tpu_custom_call.1} parent=35 // pred_check_branch
          %351 = sbr.rel (%p349) target = $region40
        $region39: #{tpu_custom_call.1} parent=35 // pred_region
          %s352 = sand.u32 %s69, 1
          %s353 = scalar_lea.sflag [#allocation5], %s352
          %s354 = sand.u32 %s69, 1
          %s355 = smul.addr %s354, 16
          %s356 = scalar_lea.vmem [#allocation6], %s355
          %357 = dma.done %s353, 256
        $region40: #{tpu_custom_call.1} parent=35 // pred_fallthru
          _
      $region36: #{tpu_custom_call.1} parent=5 // pred_fallthru
        _
    $region6: #{tpu_custom_call.1} parent=1 // loop_footer
      %s17 = sadd.s32 1, %s13
    $region7: #{tpu_custom_call.1} parent=1 // loop_footer_branch
      %12 = sbr.rel target = $region3
    $region8: #{tpu_custom_call.1} parent=1 // loop_exit
      _
    %358 = vsyncpa [#allocation4], 1
    %s359 = scalar_lea.sflag [#allocation4], 1
    %360 = vsyncpa %s359, 1
    %361 = vsyncpa [#allocation5], 1
    %s362 = scalar_lea.sflag [#allocation5], 1
    %363 = vsyncpa %s362, 1

</llo_original>
